<compile_context>
chip_gen: v7x
topology: tpu7x:2x2x1
jax: 0.10.0
libtpu: 0.0.40
codegen_flags: <defaults>
</compile_context>

<pallas_src>
import jax
import jax.numpy as jnp
from jax import lax
from jax.experimental import pallas as pl
from jax.experimental.pallas import tpu as pltpu

BN_EPS = 1e-5
LANE = 128


def _round_up(v, m):
    return (v + m - 1) // m * m


# -----------------------------------------------------------------------------
# Kernels
# -----------------------------------------------------------------------------
def _lin1_bn_relu(x_ref, w1_ref, gamma_ref, beta_ref):
    """Linear1 (no bias) -> BatchNorm1d (training stats) -> ReLU for one hidden slice.

    BN statistics are taken over the full batch: the batch axis is never tiled.
    """
    xb = x_ref[...].astype(jnp.bfloat16)                       # bf16 MXU operand
    h = jnp.dot(xb, w1_ref[...], preferred_element_type=jnp.float32)
    n_inv = 1.0 / h.shape[0]                                   # full batch size
    mean = jnp.sum(h, axis=0, keepdims=True) * n_inv
    centered = h - mean
    # Centered (two-pass) variance: cannot go negative, unlike E[h^2] - mean^2.
    var = jnp.sum(centered * centered, axis=0, keepdims=True) * n_inv
    scale = gamma_ref[...] * lax.rsqrt(var + BN_EPS)           # (1, t_h) f32
    h = jnp.maximum(centered * scale + beta_ref[...], 0.0)     # folded BN FMA + ReLU
    return h.astype(jnp.bfloat16)                              # bf16 operand for Linear2


def _single_step_kernel(x_ref, w1_ref, gamma_ref, beta_ref, w2_ref, b2_ref, o_ref):
    """Whole problem in one grid step: no accumulator scratch, bias fused into store."""
    h = _lin1_bn_relu(x_ref, w1_ref, gamma_ref, beta_ref)
    out = jnp.dot(h, w2_ref[...], preferred_element_type=jnp.float32) + b2_ref[...]
    o_ref[...] = out.astype(o_ref.dtype)


def _tiled_hidden_kernel(x_ref, w1_ref, gamma_ref, beta_ref, w2_ref, b2_ref, o_ref,
                         acc_ref):
    """Hidden (reduction) axis tiled; Linear1 + BN + ReLU run once per hidden slice."""
    k = pl.program_id(0)

    @pl.when(k == 0)
    def _():
        acc_ref[...] = jnp.zeros_like(acc_ref)

    h = _lin1_bn_relu(x_ref, w1_ref, gamma_ref, beta_ref)
    acc_ref[...] += jnp.dot(h, w2_ref[...], preferred_element_type=jnp.float32)

    @pl.when(k == pl.num_programs(0) - 1)
    def _():
        o_ref[...] = (acc_ref[...] + b2_ref[...]).astype(o_ref.dtype)


# -----------------------------------------------------------------------------
# VMEM budgeting / tile selection
# -----------------------------------------------------------------------------
def _vmem_budget_bytes():
    try:
        cap = pltpu.get_tpu_info().vmem_capacity_bytes
    except Exception:  # conservative default: v7x per-core VMEM
        cap = 64 * 1024 * 1024
    # Leave ~28 MiB headroom for Mosaic internal scratch / semaphores / spills:
    # -> ~36 MiB usable on v7x (64 MiB VMEM), ~100 MiB on v5e/v6e (128 MiB VMEM).
    return max(24 * 1024 * 1024, cap - 28 * 1024 * 1024)


def _vmem_usage(n, in_dim, out_p, t_h, n_steps, x_item, out_item):
    x_bufs = 2 if n_steps == 1 else 1           # pl.Buffered(1) applied when tiled
    u = x_bufs * n * in_dim * x_item            # x block (VMEM-resident, full batch)
    u += 2 * in_dim * t_h * 2                   # w1 slice (bf16, double-buffered)
    u += 2 * 2 * t_h * 4                        # gamma + beta slices
    u += 2 * t_h * out_p * 2                    # w2 slice (bf16, double-buffered)
    u += 2 * out_p * 4                          # b2
    u += 2 * n * out_p * out_item               # output block
    if n_steps > 1:
        u += n * out_p * 4                      # f32 accumulator scratch
    u += 3 * n * t_h * 4                        # h / centered / BN-out temporaries (f32)
    return u


def _choose_hidden_tile(n, in_dim, hid_p, out_p, x_item, out_item, budget):
    def fits(t):
        return _vmem_usage(n, in_dim, out_p, t, hid_p // t, x_item, out_item) <= budget

    if fits(hid_p):
        return hid_p                            # single step: no recompute, no scratch
    # Prefer 256-grain hidden tiles (v6e/v7x MXUs are 256 wide), then 128-grain.
    for grain in (256, LANE):
        t = (hid_p // grain) * grain
        while t >= grain:
            if hid_p % t == 0 and fits(t):
                return t
            t -= grain
    # For extreme batch sizes the (N, out_p) accumulator / x residency can still exceed
    # VMEM; that would need output tiling (reintroducing Linear1 recompute) or batch
    # tiling with a two-pass BN. Not needed for SimSiam shapes.
    return LANE


# -----------------------------------------------------------------------------
# Parameter prep (one-time) and forward wrapper
# -----------------------------------------------------------------------------
def prepare_params(w1_t, gamma, beta, w2_t, b2):
    """One-time parameter prep (call once at init, not per forward pass).

    Pads hidden/output feature dims to multiples of 128 (exact: padded entries are
    zero) and casts matmul weights to bf16 for the MXU.
      w1_t: (in_dim, hidden)   transposed Linear1 weight (no bias)
      gamma/beta: (hidden,)    BatchNorm1d affine parameters
      w2_t: (hidden, out)      transposed Linear2 weight
      b2:   (out,)             Linear2 bias
    """
    in_dim, hid = w1_t.shape
    out = w2_t.shape[1]
    hid_p, out_p = _round_up(hid, LANE), _round_up(out, LANE)
    w1p = jnp.pad(w1_t, ((0, 0), (0, hid_p - hid))).astype(jnp.bfloat16)
    w2p = jnp.pad(w2_t, ((0, hid_p - hid), (0, out_p - out))).astype(jnp.bfloat16)
    gp = jnp.pad(gamma.reshape(1, -1).astype(jnp.float32), ((0, 0), (0, hid_p - hid)))
    bp = jnp.pad(beta.reshape(1, -1).astype(jnp.float32), ((0, 0), (0, hid_p - hid)))
    b2p = jnp.pad(b2.reshape(1, -1).astype(jnp.float32), ((0, 0), (0, out_p - out)))
    return dict(w1=w1p, gamma=gp, beta=bp, w2=w2p, b2=b2p, in_dim=in_dim, out_dim=out)


def simsiam_prediction_head(x, params, *, out_dtype=None):
    """Forward pass of SimSiamPredictionHead on params from prepare_params()."""
    assert x.ndim == 2 and x.shape[1] == params["in_dim"], "x must be (batch, in_dim)"
    n = x.shape[0]                      # batch axis: never tiled (BN uses full batch)
    out_dim = params["out_dim"]
    out_dtype = out_dtype or x.dtype

    w1p, gp, bp = params["w1"], params["gamma"], params["beta"]
    w2p, b2p = params["w2"], params["b2"]
    in_dim, hid_p = w1p.shape
    out_p = w2p.shape[1]
    out_item = jnp.dtype(out_dtype).itemsize

    budget = _vmem_budget_bytes()
    x_kernel = x
    x_item = jnp.dtype(x.dtype).itemsize
    t_h = _choose_hidden_tile(n, in_dim, hid_p, out_p, x_item, out_item, budget)
    if (x_item > 2 and
            _vmem_usage(n, in_dim, out_p, t_h, hid_p // t_h, x_item, out_item) > budget):
        # x does not fit VMEM-resident in its input dtype even at the smallest hidden
        # tile: spend one extra HBM pass to halve its footprint (kernel consumes bf16).
        x_kernel = x.astype(jnp.bfloat16)
        t_h = _choose_hidden_tile(n, in_dim, hid_p, out_p, 2, out_item, budget)
    n_h = hid_p // t_h

    if n_h > 1:
        # x has a constant index map; single-buffer it so the resident copy is not
        # duplicated by the default double-buffering.
        x_spec = pl.BlockSpec((n, in_dim), lambda k: (0, 0),
                              pipeline_mode=pl.Buffered(1))
        kernel = _tiled_hidden_kernel
        scratch = [pltpu.VMEM((n, out_p), jnp.float32)]
    else:
        x_spec = pl.BlockSpec((n, in_dim), lambda k: (0, 0))
        kernel = _single_step_kernel
        scratch = []

    # TODO(synk): on v7x (2 TensorCores) a 2-way parallel output split could additionally
    # shard Linear2 across cores at the cost of duplicating Linear1; not done here to
    # keep the no-recompute structure portable across v5e/v6e.
    out = pl.pallas_call(
        kernel,
        out_shape=jax.ShapeDtypeStruct((n, out_p), out_dtype),
        grid_spec=pltpu.PrefetchScalarGridSpec(
            num_scalar_prefetch=0,
            grid=(n_h,),                                        # hidden (reduction) only
            in_specs=[
                x_spec,                                         # x: resident, full batch
                pl.BlockSpec((in_dim, t_h), lambda k: (0, k)),  # w1 hidden-slice
                pl.BlockSpec((1, t_h), lambda k: (0, k)),       # gamma slice
                pl.BlockSpec((1, t_h), lambda k: (0, k)),       # beta slice
                pl.BlockSpec((t_h, out_p), lambda k: (k, 0)),   # w2 hidden-slice
                pl.BlockSpec((1, out_p), lambda k: (0, 0)),     # b2
            ],
            out_specs=pl.BlockSpec((n, out_p), lambda k: (0, 0)),
            scratch_shapes=scratch,
        ),
        compiler_params=pltpu.CompilerParams(
            dimension_semantics=("arbitrary",),
            vmem_limit_bytes=int(budget),
        ),
    )(x_kernel, w1p, gp, bp, w2p, b2p)

    return out if out_p == out_dim else out[:, :out_dim]


# -----------------------------------------------------------------------------
# Reference + demo
# -----------------------------------------------------------------------------
def _reference(x, w1_t, gamma, beta, w2_t, b2):
    # Mirrors the kernel numerics: bf16 matmul operands, f32 accumulate, f32 BN
    # (training-mode batch statistics, biased variance).
    h = jnp.dot(x.astype(jnp.bfloat16), w1_t.astype(jnp.bfloat16),
                preferred_element_type=jnp.float32)
    mean = h.mean(axis=0, keepdims=True)
    var = ((h - mean) ** 2).mean(axis=0, keepdims=True)
    h = (h - mean) / jnp.sqrt(var + BN_EPS) * gamma.reshape(1, -1) + beta.reshape(1, -1)
    h = jnp.maximum(h, 0.0)
    return jnp.dot(h.astype(jnp.bfloat16), w2_t.astype(jnp.bfloat16),
                   preferred_element_type=jnp.float32) + b2.reshape(1, -1)


if __name__ == "__main__":
    # Small shapes consistent with the module: batch=8, in_dim=32, hidden=64, out_dim=32.
    N, in_dim, hidden_dim, out_dim = 8, 32, 64, 32

    key = jax.random.PRNGKey(0)
    kx, kw1, kw2, kb2 = jax.random.split(key, 4)

    x = jax.random.normal(kx, (N, in_dim), dtype=jnp.float32)
    # Deterministic synthetic parameters (the module __init__ only defines shapes).
    w1_t = jax.random.normal(kw1, (in_dim, hidden_dim), jnp.float32) / jnp.sqrt(in_dim * 1.0)
    gamma = jnp.ones((hidden_dim,), jnp.float32)      # BatchNorm1d affine init
    beta = jnp.zeros((hidden_dim,), jnp.float32)
    w2_t = (jax.random.normal(kw2, (hidden_dim, out_dim), jnp.float32)
            / jnp.sqrt(hidden_dim * 1.0))
    b2 = jax.random.normal(kb2, (out_dim,), jnp.float32) * 0.01

    params = prepare_params(w1_t, gamma, beta, w2_t, b2)   # one-time parameter prep
    out = simsiam_prediction_head(x, params)
    out = jax.block_until_ready(out)

    ref = _reference(x, w1_t, gamma, beta, w2_t, b2)
    assert out.shape == (N, out_dim)
    assert jnp.allclose(out, ref, atol=2e-2, rtol=2e-2), "mismatch vs JAX reference"

    print("KERNEL_OK")
</pallas_src>

<mosaic_0001>
module attributes {stable_mosaic.version = 11 : i64} {
  func.func @_single_step_kernel(%arg0: i32, %arg1: memref<8x32xf32, #tpu.memory_space<vmem>>, %arg2: memref<32x128xbf16, #tpu.memory_space<vmem>>, %arg3: memref<1x128xf32, #tpu.memory_space<vmem>>, %arg4: memref<1x128xf32, #tpu.memory_space<vmem>>, %arg5: memref<128x128xbf16, #tpu.memory_space<vmem>>, %arg6: memref<1x128xf32, #tpu.memory_space<vmem>>, %arg7: memref<8x128xf32, #tpu.memory_space<vmem>>) attributes {dimension_semantics = [#tpu.dimension_semantics<arbitrary>], iteration_bounds = array<i64: 1>, scalar_prefetch = 0 : i64, scratch_operands = 0 : i64, tpu.core_type = #tpu.core_type<tc>, window_params = [{pipeline_mode = #tpu.pipeline_mode<synchronous>, transform_indices = @transform_0, window_bounds = array<i64: 8, 32>}, {transform_indices = @transform_1, window_bounds = array<i64: 32, 128>}, {transform_indices = @transform_2, window_bounds = array<i64: 1, 128>}, {transform_indices = @transform_3, window_bounds = array<i64: 1, 128>}, {transform_indices = @transform_4, window_bounds = array<i64: 128, 128>}, {pipeline_mode = #tpu.pipeline_mode<synchronous>, transform_indices = @transform_5, window_bounds = array<i64: 1, 128>}, {pipeline_mode = #tpu.pipeline_mode<synchronous>, transform_indices = @transform_6, window_bounds = array<i64: 8, 128>}]} {
    %c0 = arith.constant 0 : index
    %c0_0 = arith.constant 0 : index
    %0 = vector.load %arg1[%c0, %c0_0] : memref<8x32xf32, #tpu.memory_space<vmem>>, vector<8x32xf32>
    %1 = arith.truncf %0 : vector<8x32xf32> to vector<8x32xbf16>
    %c0_1 = arith.constant 0 : index
    %c0_2 = arith.constant 0 : index
    %2 = vector.load %arg2[%c0_1, %c0_2] : memref<32x128xbf16, #tpu.memory_space<vmem>>, vector<32x128xbf16>
    %cst = arith.constant dense<0.000000e+00> : vector<8x128xf32>
    %3 = tpu.matmul %1, %2, %cst {dimension_numbers = #tpu.dot_dimension_numbers<[1], [0], [0], [1], [0, 0, 1, 1], [], []>} : vector<8x32xbf16>, vector<32x128xbf16>, vector<8x128xf32> -> vector<8x128xf32>
    %cst_3 = arith.constant dense<0.000000e+00> : vector<128xf32>
    %4 = vector.multi_reduction <add>, %3, %cst_3 [0] : vector<8x128xf32> to vector<128xf32>
    %5 = vector.shape_cast %4 : vector<128xf32> to vector<1x128xf32>
    %cst_4 = arith.constant 1.250000e-01 : f32
    %6 = vector.broadcast %cst_4 : f32 to vector<1x128xf32>
    %7 = arith.mulf %5, %6 : vector<1x128xf32>
    %8 = vector.broadcast %7 : vector<1x128xf32> to vector<8x128xf32>
    %9 = arith.subf %3, %8 : vector<8x128xf32>
    %10 = arith.mulf %9, %9 : vector<8x128xf32>
    %cst_5 = arith.constant dense<0.000000e+00> : vector<128xf32>
    %11 = vector.multi_reduction <add>, %10, %cst_5 [0] : vector<8x128xf32> to vector<128xf32>
    %12 = vector.shape_cast %11 : vector<128xf32> to vector<1x128xf32>
    %cst_6 = arith.constant 1.250000e-01 : f32
    %13 = vector.broadcast %cst_6 : f32 to vector<1x128xf32>
    %14 = arith.mulf %12, %13 : vector<1x128xf32>
    %c0_7 = arith.constant 0 : index
    %c0_8 = arith.constant 0 : index
    %15 = vector.load %arg3[%c0_7, %c0_8] : memref<1x128xf32, #tpu.memory_space<vmem>>, vector<1x128xf32>
    %cst_9 = arith.constant 9.99999974E-6 : f32
    %16 = vector.broadcast %cst_9 : f32 to vector<1x128xf32>
    %17 = arith.addf %14, %16 : vector<1x128xf32>
    %18 = math.rsqrt %17 : vector<1x128xf32>
    %19 = arith.mulf %15, %18 : vector<1x128xf32>
    %20 = vector.broadcast %19 : vector<1x128xf32> to vector<8x128xf32>
    %21 = arith.mulf %9, %20 : vector<8x128xf32>
    %c0_10 = arith.constant 0 : index
    %c0_11 = arith.constant 0 : index
    %22 = vector.load %arg4[%c0_10, %c0_11] : memref<1x128xf32, #tpu.memory_space<vmem>>, vector<1x128xf32>
    %23 = vector.broadcast %22 : vector<1x128xf32> to vector<8x128xf32>
    %24 = arith.addf %21, %23 : vector<8x128xf32>
    %cst_12 = arith.constant 0.000000e+00 : f32
    %25 = vector.broadcast %cst_12 : f32 to vector<8x128xf32>
    %26 = arith.maximumf %24, %25 : vector<8x128xf32>
    %27 = arith.truncf %26 : vector<8x128xf32> to vector<8x128xbf16>
    %c0_13 = arith.constant 0 : index
    %c0_14 = arith.constant 0 : index
    %28 = vector.load %arg5[%c0_13, %c0_14] : memref<128x128xbf16, #tpu.memory_space<vmem>>, vector<128x128xbf16>
    %cst_15 = arith.constant dense<0.000000e+00> : vector<8x128xf32>
    %29 = tpu.matmul %27, %28, %cst_15 {dimension_numbers = #tpu.dot_dimension_numbers<[1], [0], [0], [1], [0, 0, 1, 1], [], []>} : vector<8x128xbf16>, vector<128x128xbf16>, vector<8x128xf32> -> vector<8x128xf32>
    %c0_16 = arith.constant 0 : index
    %c0_17 = arith.constant 0 : index
    %30 = vector.load %arg6[%c0_16, %c0_17] : memref<1x128xf32, #tpu.memory_space<vmem>>, vector<1x128xf32>
    %31 = vector.broadcast %30 : vector<1x128xf32> to vector<8x128xf32>
    %32 = arith.addf %29, %31 : vector<8x128xf32>
    %c0_18 = arith.constant 0 : index
    %c0_19 = arith.constant 0 : index
    %33 = vector.load %arg7[%c0_18, %c0_19] : memref<8x128xf32, #tpu.memory_space<vmem>>, vector<8x128xf32>
    tpu.vector_store %arg7[%c0_18, %c0_19], %32 {strides = array<i32>} : memref<8x128xf32, #tpu.memory_space<vmem>>, vector<8x128xf32>,
    return
  }
  func.func @transform_0(%arg0: i32) -> (i32, i32) {
    %c0_i32 = arith.constant 0 : i32
    %c0_i32_0 = arith.constant 0 : i32
    %c0_i32_1 = arith.constant 0 : i32
    return %c0_i32, %c0_i32_0 : i32, i32
  }
  func.func @transform_1(%arg0: i32) -> (i32, i32) {
    %c0_i32 = arith.constant 0 : i32
    %c0_i32_0 = arith.constant 0 : i32
    return %c0_i32, %arg0 : i32, i32
  }
  func.func @transform_2(%arg0: i32) -> (i32, i32) {
    %c0_i32 = arith.constant 0 : i32
    %c0_i32_0 = arith.constant 0 : i32
    return %c0_i32, %arg0 : i32, i32
  }
  func.func @transform_3(%arg0: i32) -> (i32, i32) {
    %c0_i32 = arith.constant 0 : i32
    %c0_i32_0 = arith.constant 0 : i32
    return %c0_i32, %arg0 : i32, i32
  }
  func.func @transform_4(%arg0: i32) -> (i32, i32) {
    %c0_i32 = arith.constant 0 : i32
    %c0_i32_0 = arith.constant 0 : i32
    return %arg0, %c0_i32 : i32, i32
  }
  func.func @transform_5(%arg0: i32) -> (i32, i32) {
    %c0_i32 = arith.constant 0 : i32
    %c0_i32_0 = arith.constant 0 : i32
    %c0_i32_1 = arith.constant 0 : i32
    return %c0_i32, %c0_i32_0 : i32, i32
  }
  func.func @transform_6(%arg0: i32) -> (i32, i32) {
    %c0_i32 = arith.constant 0 : i32
    %c0_i32_0 = arith.constant 0 : i32
    %c0_i32_1 = arith.constant 0 : i32
    return %c0_i32, %c0_i32_0 : i32, i32
  }
}

</mosaic_0001>

<llo_original>
// kernel: tpu_custom_call.1
$region0: #{tpu_custom_call.1}
  #allocation0 [shape = 'u32[]', space=smem, size = 0x4, offset = 0x4, fixed_abs, tag = 'smem constant byte address 0x4 - core index']
  #allocation1 [shape = 'u32[144,128]{1,0:T(1,128)}', space=vmem, size = 0x12000, scoped, tag = 'internal scratch']
  %s0 = inlined_call_operand.hbm [shape: f32[8,32], index: 0, kind: input, shape index: {}]
  %s1 = inlined_call_operand.hbm [shape: bf16[32,128], index: 1, kind: input, shape index: {}]
  %s2 = inlined_call_operand.vmem [shape: f32[1,128], index: 2, kind: input, shape index: {}]
  %s3 = inlined_call_operand.vmem [shape: f32[1,128], index: 3, kind: input, shape index: {}]
  %s4 = inlined_call_operand.hbm [shape: bf16[128,128], index: 4, kind: input, shape index: {}]
  %s5 = inlined_call_operand.vmem [shape: f32[1,128], index: 5, kind: input, shape index: {}]
  %s6 = inlined_call_operand.hbm [shape: f32[8,128], index: 6, kind: output, shape index: {}]
  %s7 = sld [smem:[#allocation0]]
  $region46: #{tpu_custom_call.1} parent=0
    _
  %s9 = ssub.s32 1, %s7
  %s10 = scalar_select 0, %s9, %s7
  $region1: #{tpu_custom_call.1} parent=0
    #allocation2 [shape = 'u8[4096]{0}', space=vmem, size = 0x1000, scoped, tag = 'input window, operand 0, single buffered']
    #allocation3 [shape = 's32[1]{0}', space=sflag, size = 0x4, scoped, tag = 'scoped memory for tpu_custom_call.1']
    #allocation4 [shape = 's32[1]{0}', space=sflag, size = 0x4, scoped, tag = 'scoped memory for tpu_custom_call.1']
    #allocation5 [shape = 'u8[8192]{0}', space=vmem, size = 0x2000, scoped, tag = 'input window, operand 1, single buffered']
    #allocation6 [shape = 's32[1]{0}', space=sflag, size = 0x4, scoped, tag = 'scoped memory for tpu_custom_call.1']
    #allocation7 [shape = 'u8[32768]{0}', space=vmem, size = 0x8000, scoped, tag = 'input window, operand 4, single buffered']
    #allocation8 [shape = 'u8[4096]{0}', space=vmem, size = 0x1000, scoped, tag = 'output window, operand 0, single buffered']
    %11 = vsyncpa [#allocation3], 0
    %12 = vsyncpa [#allocation6], 0
    %13 = vsyncpa [#allocation4], 0
    // Predicated region
    $region2: #{tpu_custom_call.1} parent=1 // pred_check
      _
    $region3: #{tpu_custom_call.1} parent=1 // pred_check_branch
      %15 = sbr.rel (0) target = $region5
    $region4: #{tpu_custom_call.1} parent=1 // pred_region
      %s17 = ssub.s32 128, 128
      %18 = vsyncadd [#allocation3], %s17
      %s20 = sshll.u32 [#allocation2], 4
      %s21 = int_to_ptr.vmem [resolvable:$true] %s20
      %23 = dma.hbm_to_vmem [thread:$0]  %s0, 128, %s21, [#allocation3]
    $region5: #{tpu_custom_call.1} parent=1 // pred_fallthru
      _
    // Predicated region
    $region6: #{tpu_custom_call.1} parent=1 // pred_check
      _
    $region7: #{tpu_custom_call.1} parent=1 // pred_check_branch
      %25 = sbr.rel (0) target = $region9
    $region8: #{tpu_custom_call.1} parent=1 // pred_region
      %s27 = ssub.s32 256, 256
      %28 = vsyncadd [#allocation6], %s27
      %s29 = sshll.u32 [#allocation5], 4
      %s30 = int_to_ptr.vmem [resolvable:$true] %s29
      %35 = dma.hbm_to_vmem [thread:$0]  %s1, 256, %s30, [#allocation6], 64, 64, 4
    $region9: #{tpu_custom_call.1} parent=1 // pred_fallthru
      _
    // Predicated region
    $region10: #{tpu_custom_call.1} parent=1 // pred_check
      _
    $region11: #{tpu_custom_call.1} parent=1 // pred_check_branch
      %37 = sbr.rel (0) target = $region13
    $region12: #{tpu_custom_call.1} parent=1 // pred_region
      _
    $region13: #{tpu_custom_call.1} parent=1 // pred_fallthru
      _
    // Predicated region
    $region14: #{tpu_custom_call.1} parent=1 // pred_check
      _
    $region15: #{tpu_custom_call.1} parent=1 // pred_check_branch
      %39 = sbr.rel (0) target = $region17
    $region16: #{tpu_custom_call.1} parent=1 // pred_region
      _
    $region17: #{tpu_custom_call.1} parent=1 // pred_fallthru
      _
    // Predicated region
    $region18: #{tpu_custom_call.1} parent=1 // pred_check
      _
    $region19: #{tpu_custom_call.1} parent=1 // pred_check_branch
      %41 = sbr.rel (0) target = $region21
    $region20: #{tpu_custom_call.1} parent=1 // pred_region
      %s43 = ssub.s32 1024, 1024
      %44 = vsyncadd [#allocation6], %s43
      %s45 = sshll.u32 [#allocation7], 4
      %s46 = int_to_ptr.vmem [resolvable:$true] %s45
      %51 = dma.hbm_to_vmem [thread:$0]  %s4, 1024, %s46, [#allocation6], 64, 64, 4
    $region21: #{tpu_custom_call.1} parent=1 // pred_fallthru
      _
    // Predicated region
    $region22: #{tpu_custom_call.1} parent=1 // pred_check
      _
    $region23: #{tpu_custom_call.1} parent=1 // pred_check_branch
      %53 = sbr.rel (0) target = $region25
    $region24: #{tpu_custom_call.1} parent=1 // pred_region
      _
    $region25: #{tpu_custom_call.1} parent=1 // pred_fallthru
      _
    // Predicated region
    $region26: #{tpu_custom_call.1} parent=1 // pred_check
      _
    $region27: #{tpu_custom_call.1} parent=1 // pred_check_branch
      %55 = sbr.rel (0) target = $region29
    $region28: #{tpu_custom_call.1} parent=1 // pred_region
      %56 = dma.done [#allocation3], 128
    $region29: #{tpu_custom_call.1} parent=1 // pred_fallthru
      _
    // Predicated region
    $region30: #{tpu_custom_call.1} parent=1 // pred_check
      _
    $region31: #{tpu_custom_call.1} parent=1 // pred_check_branch
      %58 = sbr.rel (0) target = $region33
    $region32: #{tpu_custom_call.1} parent=1 // pred_region
      %59 = dma.done [#allocation6], 256
    $region33: #{tpu_custom_call.1} parent=1 // pred_fallthru
      _
    // Predicated region
    $region34: #{tpu_custom_call.1} parent=1 // pred_check
      _
    $region35: #{tpu_custom_call.1} parent=1 // pred_check_branch
      %61 = sbr.rel (0) target = $region37
    $region36: #{tpu_custom_call.1} parent=1 // pred_region
      %62 = dma.done [#allocation6], 1024
    $region37: #{tpu_custom_call.1} parent=1 // pred_fallthru
      _
    %v64 = vld [vmem:[#allocation2] sm:$0xff]
    %v65 = vpack.c.bf16 %v64, %v64
    %v66 = vld [vmem:[#allocation5] sm:$0xf]
    %v67 = vld [vmem:[#allocation5 + $0x4] sm:$0xf]
    %v68 = vld [vmem:[#allocation5 + $0x8] sm:$0xf]
    %v69 = vld [vmem:[#allocation5 + $0xc] sm:$0xf]
    %v74 = vunpack.c.l.b16 %v66
    %v75 = vunpack.c.l.b16 %v67
    %v76 = vunpack.c.l.b16 %v68
    %v77 = vunpack.c.l.b16 %v69
    %v78 = vpack.c.b16 %v75, %v74
    %v79 = vpack.c.b16 %v77, %v76
    %vm82 = vcmask 261120
    %v84 = vsel %vm82, %v65, 0
    %86 = vmatprep.subr.bf16.mxu0 0
    %87 = vmatpush1.bf16.msra.mxu0 %v78
    %88 = vmatprep.subr.bf16.mxu0 0
    %89 = vmatpush1.bf16.msra.mxu0 %v79
    %90 = vmatprep.subr.bf16.mxu0 0
    %91 = vmatpush1.bf16.msra.mxu0 0
    %92 = vmatprep.subr.bf16.mxu0 0
    %93 = vmatpush1.bf16.msra.mxu0 0
    %94 = vmatprep.subr.bf16.mxu0 0
    %95 = vmatpush1.bf16.msra.mxu0 0
    %96 = vmatprep.subr.bf16.mxu0 0
    %97 = vmatpush1.bf16.msra.mxu0 0
    %98 = vmatprep.subr.bf16.mxu0 0
    %99 = vmatpush1.bf16.msra.mxu0 0
    %100 = vmatprep.subr.bf16.mxu0 0
    %101 = vmatpush1.bf16.msra.mxu0 0
    %102 = vmatprep.subr.bf16.mxu0 0
    %103 = vmatpush1.bf16.msra.mxu0 0
    %104 = vmatprep.subr.bf16.mxu0 0
    %105 = vmatpush1.bf16.msra.mxu0 0
    %106 = vmatprep.subr.bf16.mxu0 0
    %107 = vmatpush1.bf16.msra.mxu0 0
    %108 = vmatprep.subr.bf16.mxu0 0
    %109 = vmatpush1.bf16.msra.mxu0 0
    %110 = vmatprep.subr.bf16.mxu0 0
    %111 = vmatpush1.bf16.msra.mxu0 0
    %112 = vmatprep.subr.bf16.mxu0 0
    %113 = vmatpush1.bf16.msra.mxu0 0
    %114 = vmatprep.subr.bf16.mxu0 0
    %115 = vmatpush1.bf16.msra.mxu0 0
    %116 = vmatprep.subr.bf16.mxu0 0
    %117 = vmatpush1.bf16.msra.mxu0 0
    %118 = vmatprep.mubr.bf16.mxu0 0
    %119 = vmatmul.mubr.bf16.gmra.mrb[0].mxu0 %v84
    %v120 = vpop.f32.mrb[0].mxu0
    %v121 = vadd.f32 0.0, %v120
    %v122 = vpop.f32.mrb[0].mxu0
    %v123 = vpop.f32.mrb[0].mxu0
    %v124 = vpop.f32.mrb[0].mxu0
    %125 = vdwg.mxu0
    %v126 = vrot.slane %v121, 4
    %v127 = vadd.f32 %v121, %v126
    %v128 = vrot.slane %v127, 2
    %v129 = vadd.f32 %v127, %v128
    %v130 = vrot.slane %v129, 1
    %v131 = vadd.f32 %v129, %v130
    %v132 = vmul.f32 %v131, 0.125
    %v133 = vsub.f32 %v121, %v132
    %v134 = vmul.f32 %v133, %v133
    %v135 = vrot.slane %v134, 4
    %v136 = vadd.f32 %v134, %v135
    %v137 = vrot.slane %v136, 2
    %v138 = vadd.f32 %v136, %v137
    %v139 = vrot.slane %v138, 1
    %v140 = vadd.f32 %v138, %v139
    %v141 = vmul.f32 %v140, 0.125
    %v142 = vld [vmem:[%s2] sm:$0x1]
    %v143 = vadd.f32 %v141, 1e-05
    %v144 = vrsqrt.pop %v143
    %v145 = vmul.f32 %v142, %v144
    %v147 = vlaneseq
    %v148 = vshrl.u32 %v147, 7
    %v149 = vsub.s32 0, %v148
    %v150 = vrot.slane %v145, %v149
    %v152 = vmul.f32 %v133, %v150
    %v153 = vld [vmem:[%s3] sm:$0x1]
    %v155 = vlaneseq
    %v156 = vshrl.u32 %v155, 7
    %v157 = vsub.s32 0, %v156
    %v158 = vrot.slane %v153, %v157
    %v160 = vadd.f32 %v152, %v158
    %v161 = vmax.f32 %v160, 0.0
    %v162 = vpack.c.bf16 %v161, %v161
    %v163 = vld [vmem:[#allocation7] sm:$0xf]
    %v164 = vld [vmem:[#allocation7 + $0x4] sm:$0xf]
    %v165 = vld [vmem:[#allocation7 + $0x8] sm:$0xf]
    %v166 = vld [vmem:[#allocation7 + $0xc] sm:$0xf]
    %v167 = vld [vmem:[#allocation7 + $0x10] sm:$0xf]
    %v168 = vld [vmem:[#allocation7 + $0x14] sm:$0xf]
    %v169 = vld [vmem:[#allocation7 + $0x18] sm:$0xf]
    %v170 = vld [vmem:[#allocation7 + $0x1c] sm:$0xf]
    %v171 = vld [vmem:[#allocation7 + $0x20] sm:$0xf]
    %v172 = vld [vmem:[#allocation7 + $0x24] sm:$0xf]
    %v173 = vld [vmem:[#allocation7 + $0x28] sm:$0xf]
    %v174 = vld [vmem:[#allocation7 + $0x2c] sm:$0xf]
    %v175 = vld [vmem:[#allocation7 + $0x30] sm:$0xf]
    %v176 = vld [vmem:[#allocation7 + $0x34] sm:$0xf]
    %v177 = vld [vmem:[#allocation7 + $0x38] sm:$0xf]
    %v178 = vld [vmem:[#allocation7 + $0x3c] sm:$0xf]
    %v179 = vld [vmem:[%s5] sm:$0x1]
    %v181 = vlaneseq
    %v182 = vshrl.u32 %v181, 7
    %v183 = vsub.s32 0, %v182
    %v184 = vrot.slane %v179, %v183
    %v202 = vunpack.c.l.b16 %v163
    %v203 = vunpack.c.l.b16 %v164
    %v204 = vunpack.c.l.b16 %v165
    %v205 = vunpack.c.l.b16 %v166
    %v206 = vunpack.c.l.b16 %v167
    %v207 = vunpack.c.l.b16 %v168
    %v208 = vunpack.c.l.b16 %v169
    %v209 = vunpack.c.l.b16 %v170
    %v210 = vunpack.c.l.b16 %v171
    %v211 = vunpack.c.l.b16 %v172
    %v212 = vunpack.c.l.b16 %v173
    %v213 = vunpack.c.l.b16 %v174
    %v214 = vunpack.c.l.b16 %v175
    %v215 = vunpack.c.l.b16 %v176
    %v216 = vunpack.c.l.b16 %v177
    %v217 = vunpack.c.l.b16 %v178
    %v218 = vpack.c.b16 %v203, %v202
    %v219 = vpack.c.b16 %v205, %v204
    %v220 = vpack.c.b16 %v207, %v206
    %v221 = vpack.c.b16 %v209, %v208
    %v222 = vpack.c.b16 %v211, %v210
    %v223 = vpack.c.b16 %v213, %v212
    %v224 = vpack.c.b16 %v215, %v214
    %v225 = vpack.c.b16 %v217, %v216
    %234 = vmatprep.subr.bf16.mxu0 0
    %235 = vmatpush1.bf16.msra.mxu0 %v218
    %236 = vmatprep.subr.bf16.mxu0 0
    %237 = vmatpush1.bf16.msra.mxu0 %v219
    %238 = vmatprep.subr.bf16.mxu0 0
    %239 = vmatpush1.bf16.msra.mxu0 %v220
    %240 = vmatprep.subr.bf16.mxu0 0
    %241 = vmatpush1.bf16.msra.mxu0 %v221
    %242 = vmatprep.subr.bf16.mxu0 0
    %243 = vmatpush1.bf16.msra.mxu0 %v222
    %244 = vmatprep.subr.bf16.mxu0 0
    %245 = vmatpush1.bf16.msra.mxu0 %v223
    %246 = vmatprep.subr.bf16.mxu0 0
    %247 = vmatpush1.bf16.msra.mxu0 %v224
    %248 = vmatprep.subr.bf16.mxu0 0
    %249 = vmatpush1.bf16.msra.mxu0 %v225
    %250 = vmatprep.subr.bf16.mxu0 0
    %251 = vmatpush1.bf16.msra.mxu0 0
    %252 = vmatprep.subr.bf16.mxu0 0
    %253 = vmatpush1.bf16.msra.mxu0 0
    %254 = vmatprep.subr.bf16.mxu0 0
    %255 = vmatpush1.bf16.msra.mxu0 0
    %256 = vmatprep.subr.bf16.mxu0 0
    %257 = vmatpush1.bf16.msra.mxu0 0
    %258 = vmatprep.subr.bf16.mxu0 0
    %259 = vmatpush1.bf16.msra.mxu0 0
    %260 = vmatprep.subr.bf16.mxu0 0
    %261 = vmatpush1.bf16.msra.mxu0 0
    %262 = vmatprep.subr.bf16.mxu0 0
    %263 = vmatpush1.bf16.msra.mxu0 0
    %264 = vmatprep.subr.bf16.mxu0 0
    %265 = vmatpush1.bf16.msra.mxu0 0
    %266 = vmatprep.mubr.bf16.mxu0 0
    %267 = vmatmul.mubr.bf16.gmra.mrb[0].mxu0 %v162
    %v268 = vpop.f32.mrb[0].mxu0
    %v269 = vadd.f32 %v184, %v268
    %v270 = vpop.f32.mrb[0].mxu0
    %v271 = vpop.f32.mrb[0].mxu0
    %v272 = vpop.f32.mrb[0].mxu0
    %273 = vdwg.mxu0
    %274 = vst [vmem:[#allocation8] sm:$0xff] %v269
    // Predicated region
    $region38: #{tpu_custom_call.1} parent=1 // pred_check
      _
    $region39: #{tpu_custom_call.1} parent=1 // pred_check_branch
      %276 = sbr.rel (0) target = $region41
    $region40: #{tpu_custom_call.1} parent=1 // pred_region
      %s278 = ssub.s32 128, 128
      %279 = vsyncadd [#allocation4], %s278
      %s281 = sshll.u32 [#allocation8], 4
      %s282 = int_to_ptr.vmem [resolvable:$true] %s281
      %284 = dma.vmem_to_hbm [thread:$0]  %s282, 128, %s6, [#allocation4]
    $region41: #{tpu_custom_call.1} parent=1 // pred_fallthru
      _
    // Predicated region
    $region42: #{tpu_custom_call.1} parent=1 // pred_check
      _
    $region43: #{tpu_custom_call.1} parent=1 // pred_check_branch
      %286 = sbr.rel (0) target = $region45
    $region44: #{tpu_custom_call.1} parent=1 // pred_region
      %287 = dma.done [#allocation4], 128
    $region45: #{tpu_custom_call.1} parent=1 // pred_fallthru
      _
    %288 = vsyncpa [#allocation3], 1
    %289 = vsyncpa [#allocation6], 1
    %290 = vsyncpa [#allocation4], 1

</llo_original>
